<compile_context>
chip_gen: v6e
topology: v6e:2x2x1
jax: 0.10.0
libtpu: 0.0.40
codegen_flags: <defaults>
</compile_context>

<pallas_src>
import functools

import jax
import jax.numpy as jnp
from jax.experimental import pallas as pl
from jax.experimental.pallas import tpu as pltpu

GAMMA = 1.5
ALPHA = 0.25
LANES = 128
SUBLANES = 8


def _qfocal_tile_kernel(pred_ref, true_ref, out_ref, *, gamma, alpha):
    x = pred_ref[...].astype(jnp.float32)   # logits
    z = true_ref[...].astype(jnp.float32)   # targets

    # Stable BCE-with-logits and sigmoid, sharing a single exp(-|x|).
    e = jnp.exp(-jnp.abs(x))                               # EUP exp (reused)
    bce = jnp.maximum(x, 0.0) - x * z + jnp.log1p(e)       # EUP log
    inv = pl.reciprocal(1.0 + e)                           # EUP recip (exact)
    p = jnp.where(x >= 0.0, 1.0, e) * inv                  # == sigmoid(x)

    alpha_factor = z * alpha + (1.0 - z) * (1.0 - alpha)
    t = jnp.abs(z - p)
    if gamma == 1.5:
        modulating = t * jnp.sqrt(t)                       # EUP sqrt, no pow
    else:
        modulating = jnp.power(t, gamma)

    loss = bce * alpha_factor * modulating                 # (tile_rows, 128)

    # Per-tile partial sum, reduced only across vregs (VPU adds): collapse the
    # sublane-group axis, keep a lane-dense (8, 128) slab per grid step.
    tr = loss.shape[0]
    partial = jnp.sum(loss.reshape(tr // SUBLANES, SUBLANES, LANES), axis=0)
    out_ref[0] = partial


def qfocal_loss(pred, true, gamma=GAMMA, alpha=ALPHA, reduction="mean",
                max_tile_rows=1024):
    """QFocalLoss forward (BCEWithLogitsLoss base). reduction: 'mean'|'sum'."""
    assert pred.shape == true.shape
    total = pred.size

    pred_flat = pred.reshape(-1)
    true_flat = true.reshape(-1)

    rows = pl.cdiv(total, LANES)
    if rows <= max_tile_rows:
        # Single grid step: one block covering everything (rounded up to 8).
        tile_rows = max(SUBLANES, pl.cdiv(rows, SUBLANES) * SUBLANES)
    else:
        tile_rows = max_tile_rows                   # multiple of 8 by choice
    padded_rows = pl.cdiv(rows, tile_rows) * tile_rows
    grid = padded_rows // tile_rows

    pad = padded_rows * LANES - total
    if pad:
        # pred=0, true=0.5  =>  |true - sigmoid(pred)| == 0, so padded
        # elements contribute exactly zero to the loss sum.
        pred_flat = jnp.pad(pred_flat, (0, pad), constant_values=0.0)
        true_flat = jnp.pad(true_flat, (0, pad), constant_values=0.5)

    pred2d = pred_flat.reshape(padded_rows, LANES)
    true2d = true_flat.reshape(padded_rows, LANES)

    kernel = functools.partial(_qfocal_tile_kernel, gamma=gamma, alpha=alpha)

    partials = pl.pallas_call(
        kernel,
        out_shape=jax.ShapeDtypeStruct((grid, SUBLANES, LANES), jnp.float32),
        grid_spec=pltpu.PrefetchScalarGridSpec(
            num_scalar_prefetch=0,
            grid=(grid,),
            in_specs=[
                pl.BlockSpec((tile_rows, LANES), lambda i: (i, 0)),
                pl.BlockSpec((tile_rows, LANES), lambda i: (i, 0)),
            ],
            out_specs=pl.BlockSpec((1, SUBLANES, LANES), lambda i: (i, 0, 0)),
        ),
        compiler_params=pltpu.CompilerParams(
            dimension_semantics=("parallel",)),
    )(pred2d, true2d)

    total_sum = jnp.sum(partials)   # tiny final reduce outside the kernel
    if reduction == "mean":
        return total_sum / jnp.float32(total)
    elif reduction == "sum":
        return total_sum
    else:
        # TODO(synk): reduction='none' (per-element loss output) not wired up.
        raise NotImplementedError("reduction='none' not supported")


def _reference(pred, true, gamma=GAMMA, alpha=ALPHA):
    x = pred.astype(jnp.float32)
    z = true.astype(jnp.float32)
    bce = jnp.maximum(x, 0.0) - x * z + jnp.log1p(jnp.exp(-jnp.abs(x)))
    p = jax.nn.sigmoid(x)
    af = z * alpha + (1.0 - z) * (1.0 - alpha)
    mf = jnp.abs(z - p) ** gamma
    return jnp.mean(bce * af * mf)


if __name__ == "__main__":
    key = jax.random.PRNGKey(0)
    k1, k2 = jax.random.split(key)
    # NCHW, small shapes: batch=2, channels=4, spatial=16x16.
    pred = jax.random.normal(k1, (2, 4, 16, 16), dtype=jnp.float32)
    true = (jax.random.uniform(k2, (2, 4, 16, 16)) > 0.7).astype(jnp.float32)

    out = qfocal_loss(pred, true)
    out = jax.block_until_ready(out)

    ref = _reference(pred, true)
    assert jnp.allclose(out, ref, rtol=1e-5, atol=1e-6), (out, ref)
    print("KERNEL_OK")
</pallas_src>

<mosaic_0001>
module attributes {stable_mosaic.version = 11 : i64} {
  func.func @_qfocal_tile_kernel(%arg0: i32, %arg1: memref<16x128xf32, #tpu.memory_space<vmem>>, %arg2: memref<16x128xf32, #tpu.memory_space<vmem>>, %arg3: memref<1x8x128xf32, #tpu.memory_space<vmem>>) attributes {dimension_semantics = [#tpu.dimension_semantics<parallel>], iteration_bounds = array<i64: 1>, scalar_prefetch = 0 : i64, scratch_operands = 0 : i64, tpu.core_type = #tpu.core_type<tc>, window_params = [{transform_indices = @transform_0, window_bounds = array<i64: 16, 128>}, {transform_indices = @transform_1, window_bounds = array<i64: 16, 128>}, {transform_indices = @transform_2, window_bounds = array<i64: 1, 8, 128>}]} {
    %c0 = arith.constant 0 : index
    %c0_0 = arith.constant 0 : index
    %0 = vector.load %arg1[%c0, %c0_0] : memref<16x128xf32, #tpu.memory_space<vmem>>, vector<16x128xf32>
    %c0_1 = arith.constant 0 : index
    %c0_2 = arith.constant 0 : index
    %1 = vector.load %arg2[%c0_1, %c0_2] : memref<16x128xf32, #tpu.memory_space<vmem>>, vector<16x128xf32>
    %2 = math.absf %0 : vector<16x128xf32>
    %cst = arith.constant 0.000000e+00 : f32
    %3 = vector.broadcast %cst : f32 to vector<16x128xf32>
    %4 = arith.subf %3, %2 : vector<16x128xf32>
    %5 = math.exp %4 : vector<16x128xf32>
    %cst_3 = arith.constant 0.000000e+00 : f32
    %6 = vector.broadcast %cst_3 : f32 to vector<16x128xf32>
    %7 = arith.maximumf %0, %6 : vector<16x128xf32>
    %8 = arith.mulf %0, %1 : vector<16x128xf32>
    %9 = arith.subf %7, %8 : vector<16x128xf32>
    %10 = math.log1p %5 : vector<16x128xf32>
    %11 = arith.addf %9, %10 : vector<16x128xf32>
    %cst_4 = arith.constant 1.000000e+00 : f32
    %12 = vector.broadcast %cst_4 : f32 to vector<16x128xf32>
    %13 = arith.addf %12, %5 : vector<16x128xf32>
    %14 = tpu.reciprocal %13 : vector<16x128xf32> -> vector<16x128xf32>
    %cst_5 = arith.constant 0.000000e+00 : f32
    %15 = vector.broadcast %cst_5 : f32 to vector<16x128xf32>
    %16 = arith.cmpf oge, %0, %15 : vector<16x128xf32>
    %cst_6 = arith.constant 1.000000e+00 : f32
    %17 = vector.broadcast %cst_6 : f32 to vector<16x128xf32>
    %18 = arith.select %16, %17, %5 : vector<16x128xi1>, vector<16x128xf32>
    %19 = arith.mulf %18, %14 : vector<16x128xf32>
    %cst_7 = arith.constant 2.500000e-01 : f32
    %20 = vector.broadcast %cst_7 : f32 to vector<16x128xf32>
    %21 = arith.mulf %1, %20 : vector<16x128xf32>
    %cst_8 = arith.constant 1.000000e+00 : f32
    %22 = vector.broadcast %cst_8 : f32 to vector<16x128xf32>
    %23 = arith.subf %22, %1 : vector<16x128xf32>
    %cst_9 = arith.constant 7.500000e-01 : f32
    %24 = vector.broadcast %cst_9 : f32 to vector<16x128xf32>
    %25 = arith.mulf %23, %24 : vector<16x128xf32>
    %26 = arith.addf %21, %25 : vector<16x128xf32>
    %27 = arith.subf %1, %19 : vector<16x128xf32>
    %28 = math.absf %27 : vector<16x128xf32>
    %29 = math.sqrt %28 : vector<16x128xf32>
    %30 = arith.mulf %28, %29 : vector<16x128xf32>
    %31 = arith.mulf %11, %26 : vector<16x128xf32>
    %32 = arith.mulf %31, %30 : vector<16x128xf32>
    %33 = vector.shape_cast %32 : vector<16x128xf32> to vector<2x8x128xf32>
    %cst_10 = arith.constant dense<0.000000e+00> : vector<8x128xf32>
    %34 = vector.multi_reduction <add>, %33, %cst_10 [0] : vector<2x8x128xf32> to vector<8x128xf32>
    %c0_11 = arith.constant 0 : index
    %c0_12 = arith.constant 0 : index
    %c0_13 = arith.constant 0 : index
    %35 = vector.load %arg3[%c0_11, %c0_12, %c0_13] : memref<1x8x128xf32, #tpu.memory_space<vmem>>, vector<1x8x128xf32>
    %36 = vector.shape_cast %35 : vector<1x8x128xf32> to vector<8x128xf32>
    %37 = vector.shape_cast %34 : vector<8x128xf32> to vector<1x8x128xf32>
    tpu.vector_store %arg3[%c0_11, %c0_12, %c0_13], %37 {strides = array<i32>} : memref<1x8x128xf32, #tpu.memory_space<vmem>>, vector<1x8x128xf32>,
    return
  }
  func.func @transform_0(%arg0: i32) -> (i32, i32) {
    %c0_i32 = arith.constant 0 : i32
    %c0_i32_0 = arith.constant 0 : i32
    return %arg0, %c0_i32 : i32, i32
  }
  func.func @transform_1(%arg0: i32) -> (i32, i32) {
    %c0_i32 = arith.constant 0 : i32
    %c0_i32_0 = arith.constant 0 : i32
    return %arg0, %c0_i32 : i32, i32
  }
  func.func @transform_2(%arg0: i32) -> (i32, i32, i32) {
    %c0_i32 = arith.constant 0 : i32
    %c0_i32_0 = arith.constant 0 : i32
    %c0_i32_1 = arith.constant 0 : i32
    return %arg0, %c0_i32, %c0_i32_0 : i32, i32, i32
  }
}

</mosaic_0001>

<llo_original>
// kernel: tpu_custom_call.1
$region0: #{tpu_custom_call.1}
  #allocation0 [shape = 'u32[]', space=smem, size = 0x4, offset = 0x4, fixed_abs, tag = 'smem constant byte address 0x4 - core index']
  #allocation1 [shape = 'u32[144,128]{1,0:T(1,128)}', space=vmem, size = 0x12000, scoped, tag = 'internal scratch']
  %s0 = inlined_call_operand.hbm [shape: f32[16,128], index: 0, kind: input, shape index: {}]
  %s1 = inlined_call_operand.hbm [shape: f32[16,128], index: 1, kind: input, shape index: {}]
  %s2 = inlined_call_operand.hbm [shape: f32[1,8,128], index: 2, kind: output, shape index: {}]
  %s3 = sld [smem:[#allocation0]]
  $region26: #{tpu_custom_call.1} parent=0
    _
  %s5 = ssub.s32 1, %s3
  %s6 = scalar_select 0, %s5, %s3
  $region1: #{tpu_custom_call.1} parent=0
    #allocation2 [shape = 'u8[8192]{0}', space=vmem, size = 0x2000, scoped, tag = 'input window, operand 0, single buffered']
    #allocation3 [shape = 's32[1]{0}', space=sflag, size = 0x4, scoped, tag = 'scoped memory for tpu_custom_call.1']
    #allocation4 [shape = 's32[1]{0}', space=sflag, size = 0x4, scoped, tag = 'scoped memory for tpu_custom_call.1']
    #allocation5 [shape = 'u8[8192]{0}', space=vmem, size = 0x2000, scoped, tag = 'input window, operand 1, single buffered']
    #allocation6 [shape = 's32[1]{0}', space=sflag, size = 0x4, scoped, tag = 'scoped memory for tpu_custom_call.1']
    #allocation7 [shape = 'u8[4096]{0}', space=vmem, size = 0x1000, scoped, tag = 'output window, operand 0, single buffered']
    %7 = vsyncpa [#allocation3], 0
    %8 = vsyncpa [#allocation6], 0
    %9 = vsyncpa [#allocation4], 0
    // Predicated region
    $region2: #{tpu_custom_call.1} parent=1 // pred_check
      _
    $region3: #{tpu_custom_call.1} parent=1 // pred_check_branch
      %11 = sbr.rel (0) target = $region5
    $region4: #{tpu_custom_call.1} parent=1 // pred_region
      %s13 = ssub.s32 256, 256
      %14 = vsyncadd [#allocation3], %s13
      %s15 = sshll.u32 [#allocation2], 4
      %s16 = int_to_ptr.vmem [resolvable:$true] %s15
      %21 = dma.hbm_to_vmem [thread:$0]  %s0, 256, %s16, [#allocation3], 128, 128, 8
    $region5: #{tpu_custom_call.1} parent=1 // pred_fallthru
      _
    // Predicated region
    $region6: #{tpu_custom_call.1} parent=1 // pred_check
      _
    $region7: #{tpu_custom_call.1} parent=1 // pred_check_branch
      %23 = sbr.rel (0) target = $region9
    $region8: #{tpu_custom_call.1} parent=1 // pred_region
      %s25 = ssub.s32 256, 256
      %26 = vsyncadd [#allocation6], %s25
      %s27 = sshll.u32 [#allocation5], 4
      %s28 = int_to_ptr.vmem [resolvable:$true] %s27
      %33 = dma.hbm_to_vmem [thread:$0]  %s1, 256, %s28, [#allocation6], 128, 128, 8
    $region9: #{tpu_custom_call.1} parent=1 // pred_fallthru
      _
    // Predicated region
    $region10: #{tpu_custom_call.1} parent=1 // pred_check
      _
    $region11: #{tpu_custom_call.1} parent=1 // pred_check_branch
      %35 = sbr.rel (0) target = $region13
    $region12: #{tpu_custom_call.1} parent=1 // pred_region
      %36 = dma.done [#allocation3], 256
    $region13: #{tpu_custom_call.1} parent=1 // pred_fallthru
      _
    // Predicated region
    $region14: #{tpu_custom_call.1} parent=1 // pred_check
      _
    $region15: #{tpu_custom_call.1} parent=1 // pred_check_branch
      %38 = sbr.rel (0) target = $region17
    $region16: #{tpu_custom_call.1} parent=1 // pred_region
      %39 = dma.done [#allocation6], 256
    $region17: #{tpu_custom_call.1} parent=1 // pred_fallthru
      _
    %v40 = vld [vmem:[#allocation2] sm:$0xff]
    %v41 = vld [vmem:[#allocation2 + $0x8] sm:$0xff]
    %v42 = vld [vmem:[#allocation5] sm:$0xff]
    %v43 = vld [vmem:[#allocation5 + $0x8] sm:$0xff]
    %v44 = vand.u32 2147483647, %v40
    %v45 = vand.u32 2147483647, %v41
    %v46 = vsub.f32 0.0, %v44
    %v47 = vsub.f32 0.0, %v45
    %v48 = vmul.f32 %v46, 1.442695
    %v49 = vpow.pop %v48
    %v50 = vmul.f32 %v47, 1.442695
    %v51 = vpow.pop %v50
    %v52 = vmax.f32 %v40, 0.0
    %v53 = vmax.f32 %v41, 0.0
    %v54 = vmul.f32 %v40, %v42
    %v55 = vmul.f32 %v41, %v43
    %v56 = vsub.f32 %v52, %v54
    %v57 = vsub.f32 %v53, %v55
    %v58 = vadd.f32 %v49, 1.0
    %v59 = vlog2.pop %v58
    %v60 = vmul.f32 %v59, 0.6931472
    %v61 = vmul.f32 -0.5, %v49
    %v62 = vadd.f32 %v61, 1.0
    %v63 = vmul.f32 %v62, %v49
    %v64 = vand.u32 2147483647, %v49
    %vm65 = vcmp.lt.f32.partialorder %v64, 0.0004427343
    %v66 = vsel %vm65, %v63, %v60
    %v67 = vadd.f32 %v51, 1.0
    %v68 = vlog2.pop %v67
    %v69 = vmul.f32 %v68, 0.6931472
    %v70 = vmul.f32 -0.5, %v51
    %v71 = vadd.f32 %v70, 1.0
    %v72 = vmul.f32 %v71, %v51
    %v73 = vand.u32 2147483647, %v51
    %vm74 = vcmp.lt.f32.partialorder %v73, 0.0004427343
    %v75 = vsel %vm74, %v72, %v69
    %v76 = vadd.f32 %v56, %v66
    %v77 = vadd.f32 %v57, %v75
    %v78 = vadd.f32 %v49, 1.0
    %v79 = vadd.f32 %v51, 1.0
    %v80 = vrcp.pop %v78
    %v81 = vrcp.pop %v79
    %vm82 = vcmp.ge.f32.partialorder %v40, 0.0
    %vm83 = vcmp.ge.f32.partialorder %v41, 0.0
    %v84 = vsel %vm82, 1.0, %v49
    %v85 = vsel %vm83, 1.0, %v51
    %v86 = vmul.f32 %v84, %v80
    %v87 = vmul.f32 %v85, %v81
    %v88 = vmul.f32 %v42, 0.25
    %v89 = vmul.f32 %v43, 0.25
    %v90 = vsub.f32 1.0, %v42
    %v91 = vsub.f32 1.0, %v43
    %v92 = vmul.f32 %v90, 0.75
    %v93 = vmul.f32 %v91, 0.75
    %v94 = vadd.f32 %v88, %v92
    %v95 = vadd.f32 %v89, %v93
    %v96 = vsub.f32 %v42, %v86
    %v97 = vsub.f32 %v43, %v87
    %v98 = vand.u32 2147483647, %v96
    %v99 = vand.u32 2147483647, %v97
    %v100 = vrsqrt.pop %v98
    %v101 = vmul.f32 %v98, %v100
    %vm102 = vcmp.eq.f32.partialorder %v98, inf
    %v103 = vsel %vm102, %v98, %v101
    %vm104 = vcmp.eq.f32.partialorder %v98, 0.0
    %v105 = vand.u32 %v98, 2147483648
    %v106 = vsel %vm104, %v105, %v103
    %v107 = vrsqrt.pop %v99
    %v108 = vmul.f32 %v99, %v107
    %vm109 = vcmp.eq.f32.partialorder %v99, inf
    %v110 = vsel %vm109, %v99, %v108
    %vm111 = vcmp.eq.f32.partialorder %v99, 0.0
    %v112 = vand.u32 %v99, 2147483648
    %v113 = vsel %vm111, %v112, %v110
    %v114 = vmul.f32 %v98, %v106
    %v115 = vmul.f32 %v99, %v113
    %v116 = vmul.f32 %v76, %v94
    %v117 = vmul.f32 %v77, %v95
    %v118 = vmul.f32 %v116, %v114
    %v119 = vmul.f32 %v117, %v115
    %v120 = vadd.f32 %v118, %v119
    %121 = vst [vmem:[#allocation7] sm:$0xff] %v120
    // Predicated region
    $region18: #{tpu_custom_call.1} parent=1 // pred_check
      _
    $region19: #{tpu_custom_call.1} parent=1 // pred_check_branch
      %123 = sbr.rel (0) target = $region21
    $region20: #{tpu_custom_call.1} parent=1 // pred_region
      %s125 = ssub.s32 128, 128
      %126 = vsyncadd [#allocation4], %s125
      %s128 = sshll.u32 [#allocation7], 4
      %s129 = int_to_ptr.vmem [resolvable:$true] %s128
      %131 = dma.vmem_to_hbm [thread:$0]  %s129, 128, %s2, [#allocation4]
    $region21: #{tpu_custom_call.1} parent=1 // pred_fallthru
      _
    // Predicated region
    $region22: #{tpu_custom_call.1} parent=1 // pred_check
      _
    $region23: #{tpu_custom_call.1} parent=1 // pred_check_branch
      %133 = sbr.rel (0) target = $region25
    $region24: #{tpu_custom_call.1} parent=1 // pred_region
      %134 = dma.done [#allocation4], 128
    $region25: #{tpu_custom_call.1} parent=1 // pred_fallthru
      _
    %135 = vsyncpa [#allocation3], 1
    %136 = vsyncpa [#allocation6], 1
    %137 = vsyncpa [#allocation4], 1

</llo_original>
